<compile_context>
chip_gen: v6e
topology: v6e:2x2x1
jax: 0.10.0
libtpu: 0.0.40
codegen_flags: <defaults>
</compile_context>

<pallas_src>
import numpy as np
from math import comb

import jax
import jax.numpy as jnp
from jax import lax
from jax.experimental import pallas as pl
from jax.experimental.pallas import tpu as pltpu

SUBLANES = 8
LANES = 128


def bezier_matrix(d):
    """Bernstein/Bezier coefficient matrix for T = [t^d, t^{d-1}, ..., 1]."""
    M = np.zeros((d + 1, d + 1), dtype=np.float32)
    for i in range(d + 1):          # row i multiplies t^(d-i)
        for j in range(d + 1):      # column j = Bernstein basis index
            k = d - i - j
            if k >= 0:
                M[i, j] = comb(d, j) * comb(d - j, k) * ((-1.0) ** k)
    return M


def _cdiv(a, b):
    return -(-a // b)


def _round_up(a, b):
    return _cdiv(a, b) * b


def _default_n_cores():
    """2 TensorCores per chip only on v4 (megacore) / v7x; v5e/v6e have 1."""
    try:
        kind = jax.devices()[0].device_kind.lower()
    except Exception:
        return 1
    return 2 if ("v7" in kind or "v4" in kind) else 1


def _make_sse_kernel(degree, n_points, tiles_per_core, tile_lanes,
                     first_pad_block, has_padding):
    dp1 = degree + 1

    def kernel(coef_ref, data_ref, o_ref, acc_ref):
        c = pl.program_id(0)            # per-core partial sum      (parallel)
        i = pl.program_id(1)            # tile index along stream   (arbitrary)

        @pl.when(i == 0)
        def _():
            acc_ref[...] = jnp.zeros_like(acc_ref)
            o_ref[...] = jnp.zeros_like(o_ref)

        t = data_ref[0, 0, :, :]        # (8, tile_lanes) point params
        x = data_ref[0, 1, :, :]        # (8, tile_lanes) target x
        y = data_ref[0, 2, :, :]        # (8, tile_lanes) target y

        def horner(base):
            # poly(t) = coef[base]*t^d + ... + coef[base+d]   (SMEM scalars)
            if dp1 == 1:
                return jnp.full_like(t, coef_ref[base])
            acc = coef_ref[base] * t + coef_ref[base + 1]
            for k in range(2, dp1):
                acc = acc * t + coef_ref[base + k]
            return acc

        # Rational Bezier: curve(t) = (nx(t), ny(t)) / dn(t)
        nx = horner(0)
        ny = horner(dp1)
        dn = horner(2 * dp1)

        inv = pl.reciprocal(dn, approx=True)     # EUP slot (otherwise idle)
        inv = inv * (2.0 - dn * inv)             # one Newton step (~1e-7 rel)

        ex = nx * inv - x
        ey = ny * inv - y
        sq = ex * ex + ey * ey

        if not has_padding:
            acc_ref[...] += sq
        else:
            blk = c * tiles_per_core + i

            @pl.when(blk < first_pad_block)      # hot path: no masking at all
            def _():
                acc_ref[...] += sq

            @pl.when(blk >= first_pad_block)     # only the padded tail block(s)
            def _():
                # flat point index in the block-major layout.
                # int32 is fine for n < 2^31 points (far beyond HBM capacity).
                sub = lax.broadcasted_iota(jnp.int32, sq.shape, 0)
                lane = lax.broadcasted_iota(jnp.int32, sq.shape, 1)
                flat = (blk * SUBLANES + sub) * tile_lanes + lane
                acc_ref[...] += jnp.where(flat < n_points, sq, 0.0)

        @pl.when(i == tiles_per_core - 1)
        def _():
            o_ref[...] = jnp.reshape(jnp.sum(acc_ref[...]), (1, 1, 1))

    return kernel


def pack_points(XY, ts, *, n_cores=None, max_tile_lanes=32768):
    """Pad + de-interleave the point stream ONCE into a block-major,
    lane-dense slab of shape (n_blocks, 3, 8, tile_lanes) (planes t, x, y).

    Cache the returned (packed, meta) across calls when XY/ts are fixed and
    only P/R change (the usual curve-fitting loop) so the pack copy is paid
    once, not per loss evaluation."""
    n = int(XY.shape[0])
    if n_cores is None:
        n_cores = _default_n_cores()
    cols_needed = _cdiv(n, n_cores * SUBLANES)
    tile_lanes = max(LANES, min(max_tile_lanes, _round_up(cols_needed, LANES)))
    tiles_per_core = _cdiv(n, n_cores * SUBLANES * tile_lanes)
    n_blocks = n_cores * tiles_per_core
    n_pad = n_blocks * SUBLANES * tile_lanes

    def plane(v):
        v = v.astype(jnp.float32)
        return jnp.pad(v, (0, n_pad - n)).reshape(n_blocks, SUBLANES, tile_lanes)

    packed = jnp.stack([plane(ts), plane(XY[:, 0]), plane(XY[:, 1])], axis=1)
    meta = dict(n=n, n_cores=n_cores, tiles_per_core=tiles_per_core,
                tile_lanes=tile_lanes)
    return packed, meta


def bezier_loss_packed(P, R, packed, meta, degree, reg_weight_p=0.01):
    """Loss from a pre-packed point stream (see pack_points)."""
    n = meta["n"]
    n_cores = meta["n_cores"]
    tiles_per_core = meta["tiles_per_core"]
    tile_lanes = meta["tile_lanes"]
    dp1 = degree + 1

    P = P.astype(jnp.float32)
    R = R.astype(jnp.float32)

    # ---- tiny per-curve algebra, folded in the wrapper (O(d^2) work) -------
    # curve(t) = (T @ (M diag(R) P)) / (T @ (M diag(R) 1))
    M = jnp.asarray(bezier_matrix(degree))              # (d+1, d+1)
    MR = M * jnp.reshape(R, (1, dp1))                   # == M @ diag(R)
    W = MR @ P                                          # (d+1, 2) numerator coeffs
    wden = jnp.sum(MR, axis=1)                          # (d+1,)  denominator coeffs
    coefs = jnp.concatenate([W[:, 0], W[:, 1], wden])   # (3*(d+1),) Horner order

    n_pad = n_cores * tiles_per_core * SUBLANES * tile_lanes
    first_pad_block = n // (SUBLANES * tile_lanes)
    has_padding = (n_pad != n)

    partial_sse = pl.pallas_call(
        _make_sse_kernel(degree, n, tiles_per_core, tile_lanes,
                         first_pad_block, has_padding),
        out_shape=jax.ShapeDtypeStruct((n_cores, 1, 1), jnp.float32),
        grid_spec=pltpu.PrefetchScalarGridSpec(
            num_scalar_prefetch=0,
            grid=(n_cores, tiles_per_core),
            in_specs=[
                pl.BlockSpec(memory_space=pltpu.MemorySpace.SMEM),   # Horner coeffs
                pl.BlockSpec((1, 3, SUBLANES, tile_lanes),           # packed stream
                             lambda c, i: (c * tiles_per_core + i, 0, 0, 0)),
            ],
            out_specs=pl.BlockSpec((1, 1, 1), lambda c, i: (c, 0, 0)),
            scratch_shapes=[pltpu.VMEM((SUBLANES, tile_lanes), jnp.float32)],
        ),
        compiler_params=pltpu.CompilerParams(
            dimension_semantics=("parallel", "arbitrary"),
            vmem_limit_bytes=32 * 1024 * 1024,
        ),
    )(coefs, packed)

    mse = jnp.sum(partial_sse) / (2.0 * n)

    # control-point regularizer: 2*(d+1) floats of work, kept in the wrapper.
    dP = P[1:, :] - P[:-1, :]
    reg = jnp.mean(jnp.sum(dP * dP, axis=1))
    return mse + reg_weight_p * reg


def bezier_loss(P, R, XY, ts, degree, reg_weight_p=0.01,
                *, n_cores=None, max_tile_lanes=32768):
    """Pallas implementation of BezierLoss.forward(P, R, XY, ts) (loss path)."""
    # TODO(synk): XY=None path (return curve points instead of loss) not implemented.
    packed, meta = pack_points(XY, ts, n_cores=n_cores,
                               max_tile_lanes=max_tile_lanes)
    return bezier_loss_packed(P, R, packed, meta, degree, reg_weight_p)


def bezier_loss_ref(P, R, XY, ts, degree, reg_weight_p=0.01):
    """Pure-JAX reference mirroring the PyTorch module (for sanity check)."""
    M = jnp.asarray(bezier_matrix(degree))
    T = jnp.stack([ts ** k for k in range(degree, -1, -1)], axis=1)
    C = T @ (M @ jnp.diag(R))
    C = C / jnp.sum(C, axis=1, keepdims=True)
    C = C @ P
    mse = jnp.mean((C - XY) ** 2)
    dP = P[1:] - P[:-1]
    reg = jnp.mean(jnp.sum(dP ** 2, axis=1))
    return mse + reg_weight_p * reg


def _heuristic_ts(XY):
    """Same as module's _heuristic_ts (cumulative normalized arc length)."""
    ds = jnp.sqrt(jnp.sum((XY[1:] - XY[:-1]) ** 2, axis=1))
    ds = ds / jnp.sum(ds)
    return jnp.concatenate([jnp.zeros((1,), jnp.float32), jnp.cumsum(ds)])


if __name__ == "__main__":
    degree = 3           # cubic Bezier -> d+1 = 4 control points
    N = 16               # number of sampled curve / target points

    key = jax.random.PRNGKey(0)
    kP, kR, kXY = jax.random.split(key, 3)

    P = jax.random.normal(kP, (degree + 1, 2), dtype=jnp.float32)
    R = jax.random.uniform(kR, (degree + 1,), dtype=jnp.float32,
                           minval=0.5, maxval=1.5)
    XY = jax.random.normal(kXY, (N, 2), dtype=jnp.float32)
    ts = _heuristic_ts(XY)

    loss = jax.block_until_ready(bezier_loss(P, R, XY, ts, degree,
                                             reg_weight_p=0.01))
    ref = bezier_loss_ref(P, R, XY, ts, degree, reg_weight_p=0.01)
    assert np.allclose(np.asarray(loss), np.asarray(ref),
                       rtol=1e-4, atol=1e-5), (loss, ref)

    # Exercise the multi-tile + ragged-tail mask path (tiny tiles for test only).
    N2 = 4000
    XY2 = jax.random.normal(jax.random.PRNGKey(1), (N2, 2), dtype=jnp.float32)
    ts2 = _heuristic_ts(XY2)
    loss2 = jax.block_until_ready(
        bezier_loss(P, R, XY2, ts2, degree, n_cores=1, max_tile_lanes=128))
    ref2 = bezier_loss_ref(P, R, XY2, ts2, degree)
    assert np.allclose(np.asarray(loss2), np.asarray(ref2),
                       rtol=1e-4, atol=1e-5), (loss2, ref2)

    # Exercise the 2-partial ("parallel" core axis) path and the cached
    # packed-stream API; runs as a sequential grid on single-TC chips.
    N3 = 3000
    XY3 = jax.random.normal(jax.random.PRNGKey(2), (N3, 2), dtype=jnp.float32)
    ts3 = _heuristic_ts(XY3)
    packed3, meta3 = pack_points(XY3, ts3, n_cores=2, max_tile_lanes=128)
    loss3 = jax.block_until_ready(bezier_loss_packed(P, R, packed3, meta3, degree))
    ref3 = bezier_loss_ref(P, R, XY3, ts3, degree)
    assert np.allclose(np.asarray(loss3), np.asarray(ref3),
                       rtol=1e-4, atol=1e-5), (loss3, ref3)

    print("KERNEL_OK")
</pallas_src>

<mosaic_0001>
module attributes {stable_mosaic.version = 11 : i64} {
  func.func @kernel(%arg0: i32, %arg1: i32, %arg2: memref<12xf32, #tpu.memory_space<smem>>, %arg3: memref<1x3x8x128xf32, #tpu.memory_space<vmem>>, %arg4: memref<1x1x1xf32, #tpu.memory_space<vmem>>, %arg5: memref<8x128xf32, #tpu.memory_space<vmem>>) attributes {dimension_semantics = [#tpu.dimension_semantics<parallel>, #tpu.dimension_semantics<arbitrary>], iteration_bounds = array<i64: 1, 1>, scalar_prefetch = 0 : i64, scratch_operands = 1 : i64, tpu.core_type = #tpu.core_type<tc>, window_params = [{transform_indices = @transform_0, window_bounds = array<i64: 12>}, {transform_indices = @transform_1, window_bounds = array<i64: 1, 3, 8, 128>}, {transform_indices = @transform_2, window_bounds = array<i64: 1, 1, 1>}]} {
    %c0_i32 = arith.constant 0 : i32
    %0 = arith.cmpi eq, %arg1, %c0_i32 : i32
    %1 = arith.extui %0 : i1 to i32
    %c0_i32_0 = arith.constant 0 : i32
    %2 = arith.cmpi ne, %1, %c0_i32_0 : i32
    scf.if %2 {
      %cst_19 = arith.constant 0.000000e+00 : f32
      %74 = vector.broadcast %cst_19 : f32 to vector<8x128xf32>
      %c0_20 = arith.constant 0 : index
      %c0_21 = arith.constant 0 : index
      %75 = vector.load %arg5[%c0_20, %c0_21] : memref<8x128xf32, #tpu.memory_space<vmem>>, vector<8x128xf32>
      tpu.vector_store %arg5[%c0_20, %c0_21], %74 {strides = array<i32>} : memref<8x128xf32, #tpu.memory_space<vmem>>, vector<8x128xf32>,
      %cst_22 = arith.constant 0.000000e+00 : f32
      %76 = vector.broadcast %cst_22 : f32 to vector<1x1x1xf32>
      %c0_23 = arith.constant 0 : index
      %c0_24 = arith.constant 0 : index
      %c0_25 = arith.constant 0 : index
      %77 = vector.load %arg4[%c0_23, %c0_24, %c0_25] : memref<1x1x1xf32, #tpu.memory_space<vmem>>, vector<1x1x1xf32>
      tpu.vector_store %arg4[%c0_23, %c0_24, %c0_25], %76 {strides = array<i32>} : memref<1x1x1xf32, #tpu.memory_space<vmem>>, vector<1x1x1xf32>,
    } else {
    }
    %c0 = arith.constant 0 : index
    %c0_1 = arith.constant 0 : index
    %c0_2 = arith.constant 0 : index
    %c0_3 = arith.constant 0 : index
    %3 = vector.load %arg3[%c0, %c0_1, %c0_2, %c0_3] : memref<1x3x8x128xf32, #tpu.memory_space<vmem>>, vector<1x1x8x128xf32>
    %4 = vector.shape_cast %3 : vector<1x1x8x128xf32> to vector<8x128xf32>
    %c0_4 = arith.constant 0 : index
    %c1 = arith.constant 1 : index
    %c0_5 = arith.constant 0 : index
    %c0_6 = arith.constant 0 : index
    %5 = vector.load %arg3[%c0_4, %c1, %c0_5, %c0_6] : memref<1x3x8x128xf32, #tpu.memory_space<vmem>>, vector<1x1x8x128xf32>
    %6 = vector.shape_cast %5 : vector<1x1x8x128xf32> to vector<8x128xf32>
    %c0_7 = arith.constant 0 : index
    %c2 = arith.constant 2 : index
    %c0_8 = arith.constant 0 : index
    %c0_9 = arith.constant 0 : index
    %7 = vector.load %arg3[%c0_7, %c2, %c0_8, %c0_9] : memref<1x3x8x128xf32, #tpu.memory_space<vmem>>, vector<1x1x8x128xf32>
    %8 = vector.shape_cast %7 : vector<1x1x8x128xf32> to vector<8x128xf32>
    %c0_10 = arith.constant 0 : index
    %9 = memref.load %arg2[%c0_10] : memref<12xf32, #tpu.memory_space<smem>>
    %10 = vector.broadcast %9 : f32 to vector<8x128xf32>
    %11 = arith.mulf %10, %4 : vector<8x128xf32>
    %c1_11 = arith.constant 1 : index
    %12 = memref.load %arg2[%c1_11] : memref<12xf32, #tpu.memory_space<smem>>
    %13 = vector.broadcast %12 : f32 to vector<8x128xf32>
    %14 = arith.addf %11, %13 : vector<8x128xf32>
    %15 = arith.mulf %14, %4 : vector<8x128xf32>
    %c2_12 = arith.constant 2 : index
    %16 = memref.load %arg2[%c2_12] : memref<12xf32, #tpu.memory_space<smem>>
    %17 = vector.broadcast %16 : f32 to vector<8x128xf32>
    %18 = arith.addf %15, %17 : vector<8x128xf32>
    %19 = arith.mulf %18, %4 : vector<8x128xf32>
    %c3 = arith.constant 3 : index
    %20 = memref.load %arg2[%c3] : memref<12xf32, #tpu.memory_space<smem>>
    %21 = vector.broadcast %20 : f32 to vector<8x128xf32>
    %22 = arith.addf %19, %21 : vector<8x128xf32>
    %c4 = arith.constant 4 : index
    %23 = memref.load %arg2[%c4] : memref<12xf32, #tpu.memory_space<smem>>
    %24 = vector.broadcast %23 : f32 to vector<8x128xf32>
    %25 = arith.mulf %24, %4 : vector<8x128xf32>
    %c5 = arith.constant 5 : index
    %26 = memref.load %arg2[%c5] : memref<12xf32, #tpu.memory_space<smem>>
    %27 = vector.broadcast %26 : f32 to vector<8x128xf32>
    %28 = arith.addf %25, %27 : vector<8x128xf32>
    %29 = arith.mulf %28, %4 : vector<8x128xf32>
    %c6 = arith.constant 6 : index
    %30 = memref.load %arg2[%c6] : memref<12xf32, #tpu.memory_space<smem>>
    %31 = vector.broadcast %30 : f32 to vector<8x128xf32>
    %32 = arith.addf %29, %31 : vector<8x128xf32>
    %33 = arith.mulf %32, %4 : vector<8x128xf32>
    %c7 = arith.constant 7 : index
    %34 = memref.load %arg2[%c7] : memref<12xf32, #tpu.memory_space<smem>>
    %35 = vector.broadcast %34 : f32 to vector<8x128xf32>
    %36 = arith.addf %33, %35 : vector<8x128xf32>
    %c8 = arith.constant 8 : index
    %37 = memref.load %arg2[%c8] : memref<12xf32, #tpu.memory_space<smem>>
    %38 = vector.broadcast %37 : f32 to vector<8x128xf32>
    %39 = arith.mulf %38, %4 : vector<8x128xf32>
    %c9 = arith.constant 9 : index
    %40 = memref.load %arg2[%c9] : memref<12xf32, #tpu.memory_space<smem>>
    %41 = vector.broadcast %40 : f32 to vector<8x128xf32>
    %42 = arith.addf %39, %41 : vector<8x128xf32>
    %43 = arith.mulf %42, %4 : vector<8x128xf32>
    %c10 = arith.constant 10 : index
    %44 = memref.load %arg2[%c10] : memref<12xf32, #tpu.memory_space<smem>>
    %45 = vector.broadcast %44 : f32 to vector<8x128xf32>
    %46 = arith.addf %43, %45 : vector<8x128xf32>
    %47 = arith.mulf %46, %4 : vector<8x128xf32>
    %c11 = arith.constant 11 : index
    %48 = memref.load %arg2[%c11] : memref<12xf32, #tpu.memory_space<smem>>
    %49 = vector.broadcast %48 : f32 to vector<8x128xf32>
    %50 = arith.addf %47, %49 : vector<8x128xf32>
    %51 = tpu.reciprocal %50 {approx = true} : vector<8x128xf32> -> vector<8x128xf32>
    %52 = arith.mulf %50, %51 : vector<8x128xf32>
    %cst = arith.constant 2.000000e+00 : f32
    %53 = vector.broadcast %cst : f32 to vector<8x128xf32>
    %54 = arith.subf %53, %52 : vector<8x128xf32>
    %55 = arith.mulf %51, %54 : vector<8x128xf32>
    %56 = arith.mulf %22, %55 : vector<8x128xf32>
    %57 = arith.subf %56, %6 : vector<8x128xf32>
    %58 = arith.mulf %36, %55 : vector<8x128xf32>
    %59 = arith.subf %58, %8 : vector<8x128xf32>
    %60 = arith.mulf %57, %57 : vector<8x128xf32>
    %61 = arith.mulf %59, %59 : vector<8x128xf32>
    %62 = arith.addf %60, %61 : vector<8x128xf32>
    %c1_i32 = arith.constant 1 : i32
    %63 = arith.muli %arg0, %c1_i32 : i32
    %64 = arith.addi %63, %arg1 : i32
    %c0_i32_13 = arith.constant 0 : i32
    %65 = arith.cmpi slt, %64, %c0_i32_13 : i32
    %66 = arith.extui %65 : i1 to i32
    %c0_i32_14 = arith.constant 0 : i32
    %67 = arith.cmpi ne, %66, %c0_i32_14 : i32
    scf.if %67 {
      %c0_19 = arith.constant 0 : index
      %c0_20 = arith.constant 0 : index
      %74 = vector.load %arg5[%c0_19, %c0_20] : memref<8x128xf32, #tpu.memory_space<vmem>>, vector<8x128xf32>
      %75 = arith.addf %74, %62 : vector<8x128xf32>
      %c0_21 = arith.constant 0 : index
      %c0_22 = arith.constant 0 : index
      %76 = vector.load %arg5[%c0_21, %c0_22] : memref<8x128xf32, #tpu.memory_space<vmem>>, vector<8x128xf32>
      tpu.vector_store %arg5[%c0_21, %c0_22], %75 {strides = array<i32>} : memref<8x128xf32, #tpu.memory_space<vmem>>, vector<8x128xf32>,
    } else {
    }
    %c0_i32_15 = arith.constant 0 : i32
    %68 = arith.cmpi sge, %64, %c0_i32_15 : i32
    %69 = arith.extui %68 : i1 to i32
    %c0_i32_16 = arith.constant 0 : i32
    %70 = arith.cmpi ne, %69, %c0_i32_16 : i32
    scf.if %70 {
      %74 = tpu.iota {dimensions = array<i32: 0>} : vector<8x128xi32>
      %75 = tpu.iota {dimensions = array<i32: 1>} : vector<8x128xi32>
      %c8_i32 = arith.constant 8 : i32
      %76 = arith.muli %64, %c8_i32 : i32
      %77 = vector.broadcast %76 : i32 to vector<8x128xi32>
      %78 = arith.addi %77, %74 : vector<8x128xi32>
      %c128_i32 = arith.constant 128 : i32
      %79 = vector.broadcast %c128_i32 : i32 to vector<8x128xi32>
      %80 = arith.muli %78, %79 : vector<8x128xi32>
      %81 = arith.addi %80, %75 : vector<8x128xi32>
      %c0_19 = arith.constant 0 : index
      %c0_20 = arith.constant 0 : index
      %82 = vector.load %arg5[%c0_19, %c0_20] : memref<8x128xf32, #tpu.memory_space<vmem>>, vector<8x128xf32>
      %c16_i32 = arith.constant 16 : i32
      %83 = vector.broadcast %c16_i32 : i32 to vector<8x128xi32>
      %84 = arith.cmpi slt, %81, %83 : vector<8x128xi32>
      %cst_21 = arith.constant 0.000000e+00 : f32
      %85 = vector.broadcast %cst_21 : f32 to vector<8x128xf32>
      %86 = arith.select %84, %62, %85 : vector<8x128xi1>, vector<8x128xf32>
      %87 = arith.addf %82, %86 : vector<8x128xf32>
      %c0_22 = arith.constant 0 : index
      %c0_23 = arith.constant 0 : index
      %88 = vector.load %arg5[%c0_22, %c0_23] : memref<8x128xf32, #tpu.memory_space<vmem>>, vector<8x128xf32>
      tpu.vector_store %arg5[%c0_22, %c0_23], %87 {strides = array<i32>} : memref<8x128xf32, #tpu.memory_space<vmem>>, vector<8x128xf32>,
    } else {
    }
    %c0_i32_17 = arith.constant 0 : i32
    %71 = arith.cmpi eq, %arg1, %c0_i32_17 : i32
    %72 = arith.extui %71 : i1 to i32
    %c0_i32_18 = arith.constant 0 : i32
    %73 = arith.cmpi ne, %72, %c0_i32_18 : i32
    scf.if %73 {
      %c0_19 = arith.constant 0 : index
      %c0_20 = arith.constant 0 : index
      %74 = vector.load %arg5[%c0_19, %c0_20] : memref<8x128xf32, #tpu.memory_space<vmem>>, vector<8x128xf32>
      %75 = vector.shape_cast %74 : vector<8x128xf32> to vector<1x8x128xf32>
      %cst_21 = arith.constant dense<0.000000e+00> : vector<1xf32>
      %76 = vector.multi_reduction <add>, %75, %cst_21 [1, 2] : vector<1x8x128xf32> to vector<1xf32>
      %77 = vector.shape_cast %76 : vector<1xf32> to vector<1x1x1xf32>
      %78 = vector.extract %77[0, 0, 0] : f32 from vector<1x1x1xf32>
      %79 = vector.broadcast %78 : f32 to vector<1x1x1xf32>
      %c0_22 = arith.constant 0 : index
      %c0_23 = arith.constant 0 : index
      %c0_24 = arith.constant 0 : index
      %80 = vector.load %arg4[%c0_22, %c0_23, %c0_24] : memref<1x1x1xf32, #tpu.memory_space<vmem>>, vector<1x1x1xf32>
      tpu.vector_store %arg4[%c0_22, %c0_23, %c0_24], %79 {strides = array<i32>} : memref<1x1x1xf32, #tpu.memory_space<vmem>>, vector<1x1x1xf32>,
    } else {
    }
    return
  }
  func.func @transform_0(%arg0: i32, %arg1: i32) -> i32 {
    %c0_i32 = arith.constant 0 : i32
    %c0_i32_0 = arith.constant 0 : i32
    return %c0_i32 : i32
  }
  func.func @transform_1(%arg0: i32, %arg1: i32) -> (i32, i32, i32, i32) {
    %c1_i32 = arith.constant 1 : i32
    %0 = arith.muli %arg0, %c1_i32 : i32
    %1 = arith.addi %0, %arg1 : i32
    %c0_i32 = arith.constant 0 : i32
    %c0_i32_0 = arith.constant 0 : i32
    %c0_i32_1 = arith.constant 0 : i32
    %c0_i32_2 = arith.constant 0 : i32
    return %1, %c0_i32, %c0_i32_0, %c0_i32_1 : i32, i32, i32, i32
  }
  func.func @transform_2(%arg0: i32, %arg1: i32) -> (i32, i32, i32) {
    %c0_i32 = arith.constant 0 : i32
    %c0_i32_0 = arith.constant 0 : i32
    %c0_i32_1 = arith.constant 0 : i32
    return %arg0, %c0_i32, %c0_i32_0 : i32, i32, i32
  }
}

</mosaic_0001>

<llo_original>
// kernel: tpu_custom_call.1
$region0: #{tpu_custom_call.1}
  #allocation0 [shape = 'u32[]', space=smem, size = 0x4, offset = 0x4, fixed_abs, tag = 'smem constant byte address 0x4 - core index']
  #allocation1 [shape = 'u32[144,128]{1,0:T(1,128)}', space=vmem, size = 0x12000, scoped, tag = 'internal scratch']
  #allocation2 [shape = 'f32[8,128]{1,0:T(8,128)}', space=vmem, size = 0x1000, scoped, tag = 'scratch operand']
  %s0 = inlined_call_operand.hbm [shape: f32[12], index: 0, kind: input, shape index: {}]
  %s1 = inlined_call_operand.hbm [shape: f32[1,3,8,128], index: 1, kind: input, shape index: {}]
  %s2 = inlined_call_operand.hbm [shape: f32[1,1,1], index: 2, kind: output, shape index: {}]
  %s3 = sld [smem:[#allocation0]]
  $region42: #{tpu_custom_call.1} parent=0
    _
  %s5 = ssub.s32 1, %s3
  %s6 = scalar_select 0, %s5, %s3
  $region1: #{tpu_custom_call.1} parent=0
    #allocation3 [shape = 'u8[512]{0}', space=smem, size = 0x200, scoped, tag = 'input window, operand 0, single buffered']
    #allocation4 [shape = 's32[1]{0}', space=sflag, size = 0x4, scoped, tag = 'scoped memory for tpu_custom_call.1']
    #allocation5 [shape = 's32[1]{0}', space=sflag, size = 0x4, scoped, tag = 'scoped memory for tpu_custom_call.1']
    #allocation6 [shape = 's32[1]{0}', space=sflag, size = 0x4, scoped, tag = 'scoped memory for tpu_custom_call.1']
    #allocation7 [shape = 'u8[12288]{0}', space=vmem, size = 0x3000, scoped, tag = 'input window, operand 1, single buffered']
    #allocation8 [shape = 'u8[512]{0}', space=vmem, size = 0x400, scoped, tag = 'output window, operand 0, single buffered']
    %7 = vsyncpa [#allocation6], 0
    %8 = vsyncpa [#allocation4], 0
    %9 = vsyncpa [#allocation5], 0
    // Predicated region
    $region2: #{tpu_custom_call.1} parent=1 // pred_check
      _
    $region3: #{tpu_custom_call.1} parent=1 // pred_check_branch
      %11 = sbr.rel (0) target = $region5
    $region4: #{tpu_custom_call.1} parent=1 // pred_region
      %s13 = ssub.s32 16, 16
      %14 = vsyncadd [#allocation6], %s13
      %17 = dma.hbm_to_smem %s0, 16, [#allocation3], [#allocation6]
    $region5: #{tpu_custom_call.1} parent=1 // pred_fallthru
      _
    // Predicated region
    $region6: #{tpu_custom_call.1} parent=1 // pred_check
      _
    $region7: #{tpu_custom_call.1} parent=1 // pred_check_branch
      %19 = sbr.rel (0) target = $region9
    $region8: #{tpu_custom_call.1} parent=1 // pred_region
      %s20 = sadd.s32 0, 0
      %s22 = ssub.s32 384, 384
      %23 = vsyncadd [#allocation4], %s22
      %s24 = smul.addr %s20, 3
      %s25 = smul.addr %s24, 128
      %s26 = scalar_lea.hbm %s1, %s25
      %s27 = sshll.u32 [#allocation7], 4
      %s28 = int_to_ptr.vmem [resolvable:$true] %s27
      %33 = dma.hbm_to_vmem [thread:$0]  %s26, 384, %s28, [#allocation4], 128, 128, 8
    $region9: #{tpu_custom_call.1} parent=1 // pred_fallthru
      _
    // Predicated region
    $region10: #{tpu_custom_call.1} parent=1 // pred_check
      _
    $region11: #{tpu_custom_call.1} parent=1 // pred_check_branch
      %35 = sbr.rel (0) target = $region13
    $region12: #{tpu_custom_call.1} parent=1 // pred_region
      %36 = dma.done [#allocation6], 16
    $region13: #{tpu_custom_call.1} parent=1 // pred_fallthru
      _
    // Predicated region
    $region14: #{tpu_custom_call.1} parent=1 // pred_check
      _
    $region15: #{tpu_custom_call.1} parent=1 // pred_check_branch
      %38 = sbr.rel (0) target = $region17
    $region16: #{tpu_custom_call.1} parent=1 // pred_region
      %39 = dma.done [#allocation4], 384
    $region17: #{tpu_custom_call.1} parent=1 // pred_fallthru
      _
    %40 = sfence
    %s41 = sadd.s32 0, 0
    %p42 = scmp.eq.s32.totalorder 0, 0
    // Predicated region
    $region18: #{tpu_custom_call.1} parent=1 // pred_check
      %p43 = pneg %p42
    $region19: #{tpu_custom_call.1} parent=1 // pred_check_branch
      %45 = sbr.rel (%p43) target = $region21
    $region20: #{tpu_custom_call.1} parent=1 // pred_region
      %46 = vst [vmem:[#allocation2] sm:$0xff] 0.0
      %vm47 = vcmask 0
      %48 = vst.msk [vmem:[#allocation8] sm:$0x1] %vm47, 0.0
    $region21: #{tpu_custom_call.1} parent=1 // pred_fallthru
      _
    %v49 = vld [vmem:[#allocation7] sm:$0xff]
    %s50 = scalar_lea.vmem [#allocation7], 8
    %v51 = vld [vmem:[%s50] sm:$0xff]
    %s52 = scalar_lea.vmem [#allocation7], 16
    %v53 = vld [vmem:[%s52] sm:$0xff]
    %s54 = sld [smem:[#allocation3]]
    %v55 = vstv %s54
    %v56 = vmul.f32 %v55, %v49
    %s57 = sld [smem:[#allocation3 + $0x1]]
    %v58 = vstv %s57
    %v59 = vadd.f32 %v56, %v58
    %v60 = vmul.f32 %v59, %v49
    %s61 = sld [smem:[#allocation3 + $0x2]]
    %v62 = vstv %s61
    %v63 = vadd.f32 %v60, %v62
    %v64 = vmul.f32 %v63, %v49
    %s65 = sld [smem:[#allocation3 + $0x3]]
    %v66 = vstv %s65
    %v67 = vadd.f32 %v64, %v66
    %s68 = sld [smem:[#allocation3 + $0x4]]
    %v69 = vstv %s68
    %v70 = vmul.f32 %v69, %v49
    %s71 = sld [smem:[#allocation3 + $0x5]]
    %v72 = vstv %s71
    %v73 = vadd.f32 %v70, %v72
    %v74 = vmul.f32 %v73, %v49
    %s75 = sld [smem:[#allocation3 + $0x6]]
    %v76 = vstv %s75
    %v77 = vadd.f32 %v74, %v76
    %v78 = vmul.f32 %v77, %v49
    %s79 = sld [smem:[#allocation3 + $0x7]]
    %v80 = vstv %s79
    %v81 = vadd.f32 %v78, %v80
    %s82 = sld [smem:[#allocation3 + $0x8]]
    %v83 = vstv %s82
    %v84 = vmul.f32 %v83, %v49
    %s85 = sld [smem:[#allocation3 + $0x9]]
    %v86 = vstv %s85
    %v87 = vadd.f32 %v84, %v86
    %v88 = vmul.f32 %v87, %v49
    %s89 = sld [smem:[#allocation3 + $0xa]]
    %v90 = vstv %s89
    %v91 = vadd.f32 %v88, %v90
    %v92 = vmul.f32 %v91, %v49
    %s93 = sld [smem:[#allocation3 + $0xb]]
    %v94 = vstv %s93
    %v95 = vadd.f32 %v92, %v94
    %v96 = vrcp.pop %v95
    %v97 = vmul.f32 %v95, %v96
    %v98 = vsub.f32 2.0, %v97
    %v99 = vmul.f32 %v96, %v98
    %v100 = vmul.f32 %v67, %v99
    %v101 = vsub.f32 %v100, %v51
    %v102 = vmul.f32 %v81, %v99
    %v103 = vsub.f32 %v102, %v53
    %v104 = vmul.f32 %v101, %v101
    %v105 = vmul.f32 %v103, %v103
    %v106 = vadd.f32 %v104, %v105
    %s107 = sadd.s32 0, 0
    %p108 = scmp.lt.s32.totalorder %s107, 0
    // Predicated region
    $region22: #{tpu_custom_call.1} parent=1 // pred_check
      %p109 = pneg %p108
    $region23: #{tpu_custom_call.1} parent=1 // pred_check_branch
      %111 = sbr.rel (%p109) target = $region25
    $region24: #{tpu_custom_call.1} parent=1 // pred_region
      %v112 = vld [vmem:[#allocation2] sm:$0xff]
      %v113 = vadd.f32 %v112, %v106
      %114 = vst [vmem:[#allocation2] sm:$0xff] %v113
    $region25: #{tpu_custom_call.1} parent=1 // pred_fallthru
      _
    %p115 = scmp.ge.s32.totalorder %s107, 0
    // Predicated region
    $region26: #{tpu_custom_call.1} parent=1 // pred_check
      %p116 = pneg %p115
    $region27: #{tpu_custom_call.1} parent=1 // pred_check_branch
      %118 = sbr.rel (%p116) target = $region29
    $region28: #{tpu_custom_call.1} parent=1 // pred_region
      %v119 = vlaneseq
      %v120 = vshrl.u32 %v119, 7
      %v121 = vlaneseq
      %v122 = vand.u32 %v121, 127
      %s123 = smul.u32 %s107, 8
      %v124 = vstv %s123
      %v125 = vadd.s32 %v124, %v120
      %v126 = vmul.u32 %v125, 128
      %v127 = vadd.s32 %v126, %v122
      %v128 = vld [vmem:[#allocation2] sm:$0xff]
      %vm129 = vcmp.lt.s32.totalorder %v127, 16
      %v130 = vsel %vm129, %v106, 0.0
      %v131 = vadd.f32 %v128, %v130
      %132 = vst [vmem:[#allocation2] sm:$0xff] %v131
    $region29: #{tpu_custom_call.1} parent=1 // pred_fallthru
      _
    // Predicated region
    $region30: #{tpu_custom_call.1} parent=1 // pred_check
      %p133 = pneg %p42
    $region31: #{tpu_custom_call.1} parent=1 // pred_check_branch
      %135 = sbr.rel (%p133) target = $region33
    $region32: #{tpu_custom_call.1} parent=1 // pred_region
      %v136 = vld [vmem:[#allocation2] sm:$0xff]
      %137 = vadd.xlane.f32.xlu0 %v136
      %v138 = vpop.xlane.xlu0 %137
      %v139 = vrot.slane %v138, 4
      %v140 = vadd.f32 %v138, %v139
      %v141 = vrot.slane %v140, 2
      %v142 = vadd.f32 %v140, %v141
      %v143 = vrot.slane %v142, 1
      %v144 = vadd.f32 %v142, %v143
      %s145 = vtos %v144
      %v146 = vstv %s145
      %vm147 = vcmask 0
      %148 = vst.msk [vmem:[#allocation8] sm:$0x1] %vm147, %v146
    $region33: #{tpu_custom_call.1} parent=1 // pred_fallthru
      _
    // Predicated region
    $region34: #{tpu_custom_call.1} parent=1 // pred_check
      _
    $region35: #{tpu_custom_call.1} parent=1 // pred_check_branch
      %150 = sbr.rel (0) target = $region37
    $region36: #{tpu_custom_call.1} parent=1 // pred_region
      %s152 = ssub.s32 16, 16
      %153 = vsyncadd [#allocation5], %s152
      %s155 = sshll.u32 [#allocation8], 4
      %s156 = int_to_ptr.vmem [resolvable:$true] %s155
      %158 = dma.vmem_to_hbm [thread:$0]  %s156, 16, %s2, [#allocation5]
    $region37: #{tpu_custom_call.1} parent=1 // pred_fallthru
      _
    // Predicated region
    $region38: #{tpu_custom_call.1} parent=1 // pred_check
      _
    $region39: #{tpu_custom_call.1} parent=1 // pred_check_branch
      %160 = sbr.rel (0) target = $region41
    $region40: #{tpu_custom_call.1} parent=1 // pred_region
      %161 = dma.done [#allocation5], 16
    $region41: #{tpu_custom_call.1} parent=1 // pred_fallthru
      _
    %162 = vsyncpa [#allocation4], 1
    %163 = vsyncpa [#allocation5], 1
    %164 = vsyncpa [#allocation6], 1

</llo_original>
